<compile_context>
chip_gen: v7x
topology: tpu7x:2x2x1
jax: 0.10.0
libtpu: 0.0.40
codegen_flags: <defaults>
</compile_context>

<pallas_src>
from functools import partial

import numpy as np
import jax
import jax.numpy as jnp
from jax.experimental import pallas as pl
from jax.experimental.pallas import tpu as pltpu

LN_EPS = 1e-5


# ------------------------------------------------------------------ kernel ---
def _make_kernel(N, C, H, W, P_pad):
    P = H * W
    L = N * P_pad                      # lane-batched spatial axis (all samples side by side)
    inv_n = 1.0 / float(C * P)
    # per-tap lane shift so that rolled[:, l] == h[:, l + d],  d = (kh-1)*W + (kw-1)
    shifts = [(-((kh - 1) * W + (kw - 1))) % L for kh in range(3) for kw in range(3)]

    def kernel(x_ref, p_ref, o_ref, stk_ref):
        x = x_ref[...]                                   # (C, L) lane-dense activations
        p = p_ref[...]                                   # (8C+16, P_pad) packed params

        g1, be1 = p[0 * C:1 * C], p[1 * C:2 * C]         # LayerNorm params, width P_pad
        g2, be2 = p[2 * C:3 * C], p[3 * C:4 * C]
        bm1 = jnp.concatenate([p[4 * C:5 * C]] * N, axis=1)   # (C, L) bias * lane_mask
        bm2 = jnp.concatenate([p[5 * C:6 * C]] * N, axis=1)
        w1 = p[6 * C:7 * C, 0:9 * C]                     # (C, 9C) stacked conv weights
        w2 = p[7 * C:8 * C, 0:9 * C]
        tap = jnp.concatenate([p[8 * C:8 * C + 16]] * N, axis=1)  # (16, L); rows 0..8 used

        def conv3x3(h, w_st, bias_m):
            # 9 lane-rolls (XLU) with a per-tap sublane-broadcast boundary mask (VPU), written
            # into persistent VMEM scratch, then ONE (C,9C)@(9C,L) MXU matmul for the whole batch.
            for t, s in enumerate(shifts):
                if s == 0:
                    r = h                                # center tap: pad lanes already zero
                else:
                    r = pltpu.roll(h, s, axis=1) * tap[t:t + 1, :]
                stk_ref[t * C:(t + 1) * C, :] = r
            y = jnp.dot(w_st, stk_ref[...], preferred_element_type=jnp.float32)
            return y + bias_m                            # bias pre-folded with lane mask

        def layer_norm(h, gamma, beta):
            # LayerNorm over (C,H,W) per sample; stats from each sample's tile-aligned lane half.
            halves = []
            for b in range(N):
                hb = h[:, b * P_pad:(b + 1) * P_pad]               # (C, P_pad)
                mean = jnp.sum(hb, keepdims=True) * inv_n          # (1,1)
                ex2 = jnp.sum(hb * hb, keepdims=True) * inv_n
                var = ex2 - mean * mean
                halves.append((hb - mean) * jax.lax.rsqrt(var + LN_EPS) * gamma + beta)
            return jnp.concatenate(halves, axis=1)                 # pad lanes stay zero

        h = conv3x3(x, w1, bm1)
        h = layer_norm(h, g1, be1)
        h = jnp.maximum(h, 0.0)
        h = conv3x3(h, w2, bm2)
        h = layer_norm(h, g2, be2)
        o_ref[...] = jnp.maximum(h + x, 0.0)             # residual add + final ReLU

    return kernel


# ------------------------------------------------------------------- glue ----
def prepare_params(params, H, W):
    """One-time repack of ALL parameters + conv boundary masks into a single (8C+16, P_pad)
    f32 slab (one DMA per call instead of ten)."""
    w1, b1, g1, be1, w2, b2, g2, be2 = (np.asarray(a, np.float32) for a in params)
    C = w1.shape[0]
    P = H * W
    P_pad = max(128, ((P + 127) // 128) * 128)
    assert 9 * C <= P_pad, "stacked conv weights must fit in the lane-padded slab"

    pos = np.arange(P_pad)
    h_idx, w_idx = pos // W, pos % W
    lane = (pos < P).astype(np.float32)                  # valid spatial lanes (one sample)

    def rows(a):                                         # (C,H,W) -> (C,P_pad), zero pad lanes
        out = np.zeros((C, P_pad), np.float32)
        out[:, :P] = a.reshape(C, P)
        return out

    def stack_w(w):                                      # (C,C,3,3) -> (C,9C), tap-major
        return np.transpose(w, (0, 2, 3, 1)).reshape(C, 9 * C)

    R = 8 * C + 16
    p = np.zeros((R, P_pad), np.float32)
    p[0 * C:1 * C] = rows(g1)
    p[1 * C:2 * C] = rows(be1)
    p[2 * C:3 * C] = rows(g2)
    p[3 * C:4 * C] = rows(be2)
    p[4 * C:5 * C] = b1.reshape(C, 1) * lane             # conv1 bias folded with lane mask
    p[5 * C:6 * C] = b2.reshape(C, 1) * lane             # conv2 bias folded with lane mask
    p[6 * C:7 * C, :9 * C] = stack_w(w1)
    p[7 * C:8 * C, :9 * C] = stack_w(w2)
    for kh in range(3):                                  # 9 one-row boundary masks
        for kw in range(3):
            r, s = kh - 1, kw - 1
            valid = ((pos < P) & (h_idx + r >= 0) & (h_idx + r < H)
                     & (w_idx + s >= 0) & (w_idx + s < W))
            p[8 * C + kh * 3 + kw] = valid.astype(np.float32)
    return jnp.asarray(p), P_pad


def pack_x(x, P_pad):
    """(N,C,H,W) -> lane-dense (C, N*P_pad); sample n occupies lanes [n*P_pad, n*P_pad+H*W)."""
    N, C, H, W = x.shape
    P = H * W
    xr = jnp.pad(x.reshape(N, C, P), ((0, 0), (0, 0), (0, P_pad - P)))
    return jnp.transpose(xr, (1, 0, 2)).reshape(C, N * P_pad)


def unpack_x(xp, N, C, H, W, P_pad):
    P = H * W
    return jnp.transpose(xp.reshape(C, N, P_pad), (1, 0, 2))[:, :, :P].reshape(N, C, H, W)


@partial(jax.jit, static_argnums=(2, 3))
def resblock_pallas_packed(x_packed, p_packed, H, W):
    """Core entry point: operates on the packed lane-dense layout so that multiple ResBlocks
    can be chained without re-padding/reshaping between blocks."""
    C, L = x_packed.shape
    R, P_pad = p_packed.shape
    N = L // P_pad
    kernel = _make_kernel(N, C, H, W, P_pad)
    full2 = lambda i: (0, 0)

    return pl.pallas_call(
        kernel,
        out_shape=jax.ShapeDtypeStruct((C, L), jnp.float32),
        grid=(1,),                                       # whole batch in one step
        in_specs=[
            pl.BlockSpec((C, L), full2),                 # activations (lane-dense, padded)
            pl.BlockSpec((R, P_pad), full2),             # packed params/weights/masks
        ],
        out_specs=pl.BlockSpec((C, L), full2),
        scratch_shapes=[pltpu.VMEM((9 * C, L), jnp.float32)],   # stacked conv taps
        compiler_params=pltpu.CompilerParams(dimension_semantics=("arbitrary",)),
    )(x_packed, p_packed)


# -------------------------------------------------------------- reference ----
def resblock_ref(x, params):
    (w1, b1, g1, be1, w2, b2, g2, be2) = params

    def conv(h, w, b):
        y = jax.lax.conv_general_dilated(
            h, w, window_strides=(1, 1), padding="SAME",
            dimension_numbers=("NCHW", "OIHW", "NCHW"))
        return y + b[None, :, None, None]

    def ln(h, gamma, beta):
        mu = jnp.mean(h, axis=(1, 2, 3), keepdims=True)
        var = jnp.mean((h - mu) ** 2, axis=(1, 2, 3), keepdims=True)
        return (h - mu) * jax.lax.rsqrt(var + LN_EPS) * gamma + beta

    res = x
    h = conv(x, w1, b1)
    h = ln(h, g1, be1)
    h = jax.nn.relu(h)
    h = conv(h, w2, b2)
    h = ln(h, g2, be2)
    return jax.nn.relu(h + res)


# ------------------------------------------------------------------- main ----
if __name__ == "__main__":
    # ResBlock(hidden_dim=8, game_shape=(6, 7))  (Connect-Four board), batch=2
    N, C, H, W = 2, 8, 6, 7

    key = jax.random.PRNGKey(0)
    ks = jax.random.split(key, 9)
    w1 = 0.1 * jax.random.normal(ks[0], (C, C, 3, 3), jnp.float32)
    b1 = 0.1 * jax.random.normal(ks[1], (C,), jnp.float32)
    g1 = 1.0 + 0.1 * jax.random.normal(ks[2], (C, H, W), jnp.float32)
    be1 = 0.1 * jax.random.normal(ks[3], (C, H, W), jnp.float32)
    w2 = 0.1 * jax.random.normal(ks[4], (C, C, 3, 3), jnp.float32)
    b2 = 0.1 * jax.random.normal(ks[5], (C,), jnp.float32)
    g2 = 1.0 + 0.1 * jax.random.normal(ks[6], (C, H, W), jnp.float32)
    be2 = 0.1 * jax.random.normal(ks[7], (C, H, W), jnp.float32)
    x = jax.random.normal(ks[8], (N, C, H, W), jnp.float32)
    params = (w1, b1, g1, be1, w2, b2, g2, be2)

    p_packed, P_pad = prepare_params(params, H, W)       # one-time packing, hoisted
    x_packed = pack_x(x, P_pad)                          # layout conversion (done once per tower)

    out_packed = jax.block_until_ready(resblock_pallas_packed(x_packed, p_packed, H, W))
    out = unpack_x(out_packed, N, C, H, W, P_pad)

    ref = jax.block_until_ready(resblock_ref(x, params))
    max_err = float(jnp.max(jnp.abs(out - ref)))
    assert max_err < 1e-4, f"mismatch vs reference: max abs err = {max_err}"

    print("KERNEL_OK")
</pallas_src>

<mosaic_0001>
module attributes {stable_mosaic.version = 11 : i64} {
  func.func @kernel(%arg0: i32, %arg1: memref<8x256xf32, #tpu.memory_space<vmem>>, %arg2: memref<80x128xf32, #tpu.memory_space<vmem>>, %arg3: memref<8x256xf32, #tpu.memory_space<vmem>>, %arg4: memref<72x256xf32, #tpu.memory_space<vmem>>) attributes {dimension_semantics = [#tpu.dimension_semantics<arbitrary>], iteration_bounds = array<i64: 1>, scalar_prefetch = 0 : i64, scratch_operands = 1 : i64, tpu.core_type = #tpu.core_type<tc>, window_params = [{pipeline_mode = #tpu.pipeline_mode<synchronous>, transform_indices = @transform_0, window_bounds = array<i64: 8, 256>}, {pipeline_mode = #tpu.pipeline_mode<synchronous>, transform_indices = @transform_1, window_bounds = array<i64: 80, 128>}, {pipeline_mode = #tpu.pipeline_mode<synchronous>, transform_indices = @transform_2, window_bounds = array<i64: 8, 256>}]} {
    %c0 = arith.constant 0 : index
    %c0_0 = arith.constant 0 : index
    %0 = vector.load %arg1[%c0, %c0_0] : memref<8x256xf32, #tpu.memory_space<vmem>>, vector<8x256xf32>
    %c0_1 = arith.constant 0 : index
    %c0_2 = arith.constant 0 : index
    %1 = vector.load %arg2[%c0_1, %c0_2] : memref<80x128xf32, #tpu.memory_space<vmem>>, vector<80x128xf32>
    %2 = vector.extract_strided_slice %1 {offsets = [0, 0], sizes = [8, 128], strides = [1, 1]} : vector<80x128xf32> to vector<8x128xf32>
    %3 = vector.extract_strided_slice %1 {offsets = [8, 0], sizes = [8, 128], strides = [1, 1]} : vector<80x128xf32> to vector<8x128xf32>
    %4 = vector.extract_strided_slice %1 {offsets = [16, 0], sizes = [8, 128], strides = [1, 1]} : vector<80x128xf32> to vector<8x128xf32>
    %5 = vector.extract_strided_slice %1 {offsets = [24, 0], sizes = [8, 128], strides = [1, 1]} : vector<80x128xf32> to vector<8x128xf32>
    %6 = vector.extract_strided_slice %1 {offsets = [32, 0], sizes = [8, 128], strides = [1, 1]} : vector<80x128xf32> to vector<8x128xf32>
    %7 = tpu.concatenate %6, %6 in 1 : vector<8x128xf32>, vector<8x128xf32> -> vector<8x256xf32>
    %8 = vector.extract_strided_slice %1 {offsets = [40, 0], sizes = [8, 128], strides = [1, 1]} : vector<80x128xf32> to vector<8x128xf32>
    %9 = tpu.concatenate %8, %8 in 1 : vector<8x128xf32>, vector<8x128xf32> -> vector<8x256xf32>
    %10 = vector.extract_strided_slice %1 {offsets = [48, 0], sizes = [8, 72], strides = [1, 1]} : vector<80x128xf32> to vector<8x72xf32>
    %11 = vector.extract_strided_slice %1 {offsets = [56, 0], sizes = [8, 72], strides = [1, 1]} : vector<80x128xf32> to vector<8x72xf32>
    %12 = vector.extract_strided_slice %1 {offsets = [64, 0], sizes = [16, 128], strides = [1, 1]} : vector<80x128xf32> to vector<16x128xf32>
    %13 = tpu.concatenate %12, %12 in 1 : vector<16x128xf32>, vector<16x128xf32> -> vector<16x256xf32>
    %c8_i32 = arith.constant 8 : i32
    %14 = tpu.dynamic_rotate %0 by %c8_i32 dim 1 : vector<8x256xf32>, i32 -> vector<8x256xf32>
    %15 = vector.extract_strided_slice %13 {offsets = [0, 0], sizes = [1, 256], strides = [1, 1]} : vector<16x256xf32> to vector<1x256xf32>
    %16 = vector.broadcast %15 : vector<1x256xf32> to vector<8x256xf32>
    %17 = arith.mulf %14, %16 : vector<8x256xf32>
    %c0_3 = arith.constant 0 : index
    %c0_4 = arith.constant 0 : index
    %18 = vector.load %arg4[%c0_3, %c0_4] : memref<72x256xf32, #tpu.memory_space<vmem>>, vector<8x256xf32>
    tpu.vector_store %arg4[%c0_3, %c0_4], %17 {strides = array<i32>} : memref<72x256xf32, #tpu.memory_space<vmem>>, vector<8x256xf32>,
    %c7_i32 = arith.constant 7 : i32
    %19 = tpu.dynamic_rotate %0 by %c7_i32 dim 1 : vector<8x256xf32>, i32 -> vector<8x256xf32>
    %20 = vector.extract_strided_slice %13 {offsets = [1, 0], sizes = [1, 256], strides = [1, 1]} : vector<16x256xf32> to vector<1x256xf32>
    %21 = vector.broadcast %20 : vector<1x256xf32> to vector<8x256xf32>
    %22 = arith.mulf %19, %21 : vector<8x256xf32>
    %c8 = arith.constant 8 : index
    %c0_5 = arith.constant 0 : index
    %23 = vector.load %arg4[%c8, %c0_5] : memref<72x256xf32, #tpu.memory_space<vmem>>, vector<8x256xf32>
    tpu.vector_store %arg4[%c8, %c0_5], %22 {strides = array<i32>} : memref<72x256xf32, #tpu.memory_space<vmem>>, vector<8x256xf32>,
    %c6_i32 = arith.constant 6 : i32
    %24 = tpu.dynamic_rotate %0 by %c6_i32 dim 1 : vector<8x256xf32>, i32 -> vector<8x256xf32>
    %25 = vector.extract_strided_slice %13 {offsets = [2, 0], sizes = [1, 256], strides = [1, 1]} : vector<16x256xf32> to vector<1x256xf32>
    %26 = vector.broadcast %25 : vector<1x256xf32> to vector<8x256xf32>
    %27 = arith.mulf %24, %26 : vector<8x256xf32>
    %c16 = arith.constant 16 : index
    %c0_6 = arith.constant 0 : index
    %28 = vector.load %arg4[%c16, %c0_6] : memref<72x256xf32, #tpu.memory_space<vmem>>, vector<8x256xf32>
    tpu.vector_store %arg4[%c16, %c0_6], %27 {strides = array<i32>} : memref<72x256xf32, #tpu.memory_space<vmem>>, vector<8x256xf32>,
    %c1_i32 = arith.constant 1 : i32
    %29 = tpu.dynamic_rotate %0 by %c1_i32 dim 1 : vector<8x256xf32>, i32 -> vector<8x256xf32>
    %30 = vector.extract_strided_slice %13 {offsets = [3, 0], sizes = [1, 256], strides = [1, 1]} : vector<16x256xf32> to vector<1x256xf32>
    %31 = vector.broadcast %30 : vector<1x256xf32> to vector<8x256xf32>
    %32 = arith.mulf %29, %31 : vector<8x256xf32>
    %c24 = arith.constant 24 : index
    %c0_7 = arith.constant 0 : index
    %33 = vector.load %arg4[%c24, %c0_7] : memref<72x256xf32, #tpu.memory_space<vmem>>, vector<8x256xf32>
    tpu.vector_store %arg4[%c24, %c0_7], %32 {strides = array<i32>} : memref<72x256xf32, #tpu.memory_space<vmem>>, vector<8x256xf32>,
    %c32 = arith.constant 32 : index
    %c0_8 = arith.constant 0 : index
    %34 = vector.load %arg4[%c32, %c0_8] : memref<72x256xf32, #tpu.memory_space<vmem>>, vector<8x256xf32>
    tpu.vector_store %arg4[%c32, %c0_8], %0 {strides = array<i32>} : memref<72x256xf32, #tpu.memory_space<vmem>>, vector<8x256xf32>,
    %c255_i32 = arith.constant 255 : i32
    %35 = tpu.dynamic_rotate %0 by %c255_i32 dim 1 : vector<8x256xf32>, i32 -> vector<8x256xf32>
    %36 = vector.extract_strided_slice %13 {offsets = [5, 0], sizes = [1, 256], strides = [1, 1]} : vector<16x256xf32> to vector<1x256xf32>
    %37 = vector.broadcast %36 : vector<1x256xf32> to vector<8x256xf32>
    %38 = arith.mulf %35, %37 : vector<8x256xf32>
    %c40 = arith.constant 40 : index
    %c0_9 = arith.constant 0 : index
    %39 = vector.load %arg4[%c40, %c0_9] : memref<72x256xf32, #tpu.memory_space<vmem>>, vector<8x256xf32>
    tpu.vector_store %arg4[%c40, %c0_9], %38 {strides = array<i32>} : memref<72x256xf32, #tpu.memory_space<vmem>>, vector<8x256xf32>,
    %c250_i32 = arith.constant 250 : i32
    %40 = tpu.dynamic_rotate %0 by %c250_i32 dim 1 : vector<8x256xf32>, i32 -> vector<8x256xf32>
    %41 = vector.extract_strided_slice %13 {offsets = [6, 0], sizes = [1, 256], strides = [1, 1]} : vector<16x256xf32> to vector<1x256xf32>
    %42 = vector.broadcast %41 : vector<1x256xf32> to vector<8x256xf32>
    %43 = arith.mulf %40, %42 : vector<8x256xf32>
    %c48 = arith.constant 48 : index
    %c0_10 = arith.constant 0 : index
    %44 = vector.load %arg4[%c48, %c0_10] : memref<72x256xf32, #tpu.memory_space<vmem>>, vector<8x256xf32>
    tpu.vector_store %arg4[%c48, %c0_10], %43 {strides = array<i32>} : memref<72x256xf32, #tpu.memory_space<vmem>>, vector<8x256xf32>,
    %c249_i32 = arith.constant 249 : i32
    %45 = tpu.dynamic_rotate %0 by %c249_i32 dim 1 : vector<8x256xf32>, i32 -> vector<8x256xf32>
    %46 = vector.extract_strided_slice %13 {offsets = [7, 0], sizes = [1, 256], strides = [1, 1]} : vector<16x256xf32> to vector<1x256xf32>
    %47 = vector.broadcast %46 : vector<1x256xf32> to vector<8x256xf32>
    %48 = arith.mulf %45, %47 : vector<8x256xf32>
    %c56 = arith.constant 56 : index
    %c0_11 = arith.constant 0 : index
    %49 = vector.load %arg4[%c56, %c0_11] : memref<72x256xf32, #tpu.memory_space<vmem>>, vector<8x256xf32>
    tpu.vector_store %arg4[%c56, %c0_11], %48 {strides = array<i32>} : memref<72x256xf32, #tpu.memory_space<vmem>>, vector<8x256xf32>,
    %c248_i32 = arith.constant 248 : i32
    %50 = tpu.dynamic_rotate %0 by %c248_i32 dim 1 : vector<8x256xf32>, i32 -> vector<8x256xf32>
    %51 = vector.extract_strided_slice %13 {offsets = [8, 0], sizes = [1, 256], strides = [1, 1]} : vector<16x256xf32> to vector<1x256xf32>
    %52 = vector.broadcast %51 : vector<1x256xf32> to vector<8x256xf32>
    %53 = arith.mulf %50, %52 : vector<8x256xf32>
    %c64 = arith.constant 64 : index
    %c0_12 = arith.constant 0 : index
    %54 = vector.load %arg4[%c64, %c0_12] : memref<72x256xf32, #tpu.memory_space<vmem>>, vector<8x256xf32>
    tpu.vector_store %arg4[%c64, %c0_12], %53 {strides = array<i32>} : memref<72x256xf32, #tpu.memory_space<vmem>>, vector<8x256xf32>,
    %c0_13 = arith.constant 0 : index
    %c0_14 = arith.constant 0 : index
    %55 = vector.load %arg4[%c0_13, %c0_14] : memref<72x256xf32, #tpu.memory_space<vmem>>, vector<72x256xf32>
    %cst = arith.constant dense<0.000000e+00> : vector<8x256xf32>
    %56 = tpu.matmul %10, %55, %cst {dimension_numbers = #tpu.dot_dimension_numbers<[1], [0], [0], [1], [0, 0, 1, 1], [], []>} : vector<8x72xf32>, vector<72x256xf32>, vector<8x256xf32> -> vector<8x256xf32>
    %57 = arith.addf %56, %7 : vector<8x256xf32>
    %58 = vector.extract_strided_slice %57 {offsets = [0, 0], sizes = [8, 128], strides = [1, 1]} : vector<8x256xf32> to vector<8x128xf32>
    %59 = vector.shape_cast %58 : vector<8x128xf32> to vector<1x8x128xf32>
    %cst_15 = arith.constant dense<0.000000e+00> : vector<1xf32>
    %60 = vector.multi_reduction <add>, %59, %cst_15 [1, 2] : vector<1x8x128xf32> to vector<1xf32>
    %61 = vector.shape_cast %60 : vector<1xf32> to vector<1x1x1xf32>
    %62 = vector.extract %61[0, 0, 0] : f32 from vector<1x1x1xf32>
    %63 = vector.broadcast %62 : f32 to vector<1x1xf32>
    %cst_16 = arith.constant 0.00297619053 : f32
    %64 = vector.broadcast %cst_16 : f32 to vector<1x1xf32>
    %65 = arith.mulf %63, %64 : vector<1x1xf32>
    %66 = arith.mulf %58, %58 : vector<8x128xf32>
    %67 = vector.shape_cast %66 : vector<8x128xf32> to vector<1x8x128xf32>
    %cst_17 = arith.constant dense<0.000000e+00> : vector<1xf32>
    %68 = vector.multi_reduction <add>, %67, %cst_17 [1, 2] : vector<1x8x128xf32> to vector<1xf32>
    %69 = vector.shape_cast %68 : vector<1xf32> to vector<1x1x1xf32>
    %70 = vector.extract %69[0, 0, 0] : f32 from vector<1x1x1xf32>
    %71 = vector.broadcast %70 : f32 to vector<1x1xf32>
    %cst_18 = arith.constant 0.00297619053 : f32
    %72 = vector.broadcast %cst_18 : f32 to vector<1x1xf32>
    %73 = arith.mulf %71, %72 : vector<1x1xf32>
    %74 = arith.mulf %65, %65 : vector<1x1xf32>
    %75 = arith.subf %73, %74 : vector<1x1xf32>
    %76 = vector.broadcast %65 : vector<1x1xf32> to vector<8x128xf32>
    %77 = arith.subf %58, %76 : vector<8x128xf32>
    %cst_19 = arith.constant 9.99999974E-6 : f32
    %78 = vector.broadcast %cst_19 : f32 to vector<1x1xf32>
    %79 = arith.addf %75, %78 : vector<1x1xf32>
    %80 = math.rsqrt %79 : vector<1x1xf32>
    %81 = vector.broadcast %80 : vector<1x1xf32> to vector<8x128xf32>
    %82 = arith.mulf %77, %81 : vector<8x128xf32>
    %83 = arith.mulf %82, %2 : vector<8x128xf32>
    %84 = arith.addf %83, %3 : vector<8x128xf32>
    %85 = vector.extract_strided_slice %57 {offsets = [0, 128], sizes = [8, 128], strides = [1, 1]} : vector<8x256xf32> to vector<8x128xf32>
    %86 = vector.shape_cast %85 : vector<8x128xf32> to vector<1x8x128xf32>
    %cst_20 = arith.constant dense<0.000000e+00> : vector<1xf32>
    %87 = vector.multi_reduction <add>, %86, %cst_20 [1, 2] : vector<1x8x128xf32> to vector<1xf32>
    %88 = vector.shape_cast %87 : vector<1xf32> to vector<1x1x1xf32>
    %89 = vector.extract %88[0, 0, 0] : f32 from vector<1x1x1xf32>
    %90 = vector.broadcast %89 : f32 to vector<1x1xf32>
    %cst_21 = arith.constant 0.00297619053 : f32
    %91 = vector.broadcast %cst_21 : f32 to vector<1x1xf32>
    %92 = arith.mulf %90, %91 : vector<1x1xf32>
    %93 = arith.mulf %85, %85 : vector<8x128xf32>
    %94 = vector.shape_cast %93 : vector<8x128xf32> to vector<1x8x128xf32>
    %cst_22 = arith.constant dense<0.000000e+00> : vector<1xf32>
    %95 = vector.multi_reduction <add>, %94, %cst_22 [1, 2] : vector<1x8x128xf32> to vector<1xf32>
    %96 = vector.shape_cast %95 : vector<1xf32> to vector<1x1x1xf32>
    %97 = vector.extract %96[0, 0, 0] : f32 from vector<1x1x1xf32>
    %98 = vector.broadcast %97 : f32 to vector<1x1xf32>
    %cst_23 = arith.constant 0.00297619053 : f32
    %99 = vector.broadcast %cst_23 : f32 to vector<1x1xf32>
    %100 = arith.mulf %98, %99 : vector<1x1xf32>
    %101 = arith.mulf %92, %92 : vector<1x1xf32>
    %102 = arith.subf %100, %101 : vector<1x1xf32>
    %103 = vector.broadcast %92 : vector<1x1xf32> to vector<8x128xf32>
    %104 = arith.subf %85, %103 : vector<8x128xf32>
    %cst_24 = arith.constant 9.99999974E-6 : f32
    %105 = vector.broadcast %cst_24 : f32 to vector<1x1xf32>
    %106 = arith.addf %102, %105 : vector<1x1xf32>
    %107 = math.rsqrt %106 : vector<1x1xf32>
    %108 = vector.broadcast %107 : vector<1x1xf32> to vector<8x128xf32>
    %109 = arith.mulf %104, %108 : vector<8x128xf32>
    %110 = arith.mulf %109, %2 : vector<8x128xf32>
    %111 = arith.addf %110, %3 : vector<8x128xf32>
    %112 = tpu.concatenate %84, %111 in 1 : vector<8x128xf32>, vector<8x128xf32> -> vector<8x256xf32>
    %cst_25 = arith.constant 0.000000e+00 : f32
    %113 = vector.broadcast %cst_25 : f32 to vector<8x256xf32>
    %114 = arith.maximumf %112, %113 : vector<8x256xf32>
    %c8_i32_26 = arith.constant 8 : i32
    %115 = tpu.dynamic_rotate %114 by %c8_i32_26 dim 1 : vector<8x256xf32>, i32 -> vector<8x256xf32>
    %116 = vector.extract_strided_slice %13 {offsets = [0, 0], sizes = [1, 256], strides = [1, 1]} : vector<16x256xf32> to vector<1x256xf32>
    %117 = vector.broadcast %116 : vector<1x256xf32> to vector<8x256xf32>
    %118 = arith.mulf %115, %117 : vector<8x256xf32>
    %c0_27 = arith.constant 0 : index
    %c0_28 = arith.constant 0 : index
    %119 = vector.load %arg4[%c0_27, %c0_28] : memref<72x256xf32, #tpu.memory_space<vmem>>, vector<8x256xf32>
    tpu.vector_store %arg4[%c0_27, %c0_28], %118 {strides = array<i32>} : memref<72x256xf32, #tpu.memory_space<vmem>>, vector<8x256xf32>,
    %c7_i32_29 = arith.constant 7 : i32
    %120 = tpu.dynamic_rotate %114 by %c7_i32_29 dim 1 : vector<8x256xf32>, i32 -> vector<8x256xf32>
    %121 = vector.extract_strided_slice %13 {offsets = [1, 0], sizes = [1, 256], strides = [1, 1]} : vector<16x256xf32> to vector<1x256xf32>
    %122 = vector.broadcast %121 : vector<1x256xf32> to vector<8x256xf32>
    %123 = arith.mulf %120, %122 : vector<8x256xf32>
    %c8_30 = arith.constant 8 : index
    %c0_31 = arith.constant 0 : index
    %124 = vector.load %arg4[%c8_30, %c0_31] : memref<72x256xf32, #tpu.memory_space<vmem>>, vector<8x256xf32>
    tpu.vector_store %arg4[%c8_30, %c0_31], %123 {strides = array<i32>} : memref<72x256xf32, #tpu.memory_space<vmem>>, vector<8x256xf32>,
    %c6_i32_32 = arith.constant 6 : i32
    %125 = tpu.dynamic_rotate %114 by %c6_i32_32 dim 1 : vector<8x256xf32>, i32 -> vector<8x256xf32>
    %126 = vector.extract_strided_slice %13 {offsets = [2, 0], sizes = [1, 256], strides = [1, 1]} : vector<16x256xf32> to vector<1x256xf32>
    %127 = vector.broadcast %126 : vector<1x256xf32> to vector<8x256xf32>
    %128 = arith.mulf %125, %127 : vector<8x256xf32>
    %c16_33 = arith.constant 16 : index
    %c0_34 = arith.constant 0 : index
    %129 = vector.load %arg4[%c16_33, %c0_34] : memref<72x256xf32, #tpu.memory_space<vmem>>, vector<8x256xf32>
    tpu.vector_store %arg4[%c16_33, %c0_34], %128 {strides = array<i32>} : memref<72x256xf32, #tpu.memory_space<vmem>>, vector<8x256xf32>,
    %c1_i32_35 = arith.constant 1 : i32
    %130 = tpu.dynamic_rotate %114 by %c1_i32_35 dim 1 : vector<8x256xf32>, i32 -> vector<8x256xf32>
    %131 = vector.extract_strided_slice %13 {offsets = [3, 0], sizes = [1, 256], strides = [1, 1]} : vector<16x256xf32> to vector<1x256xf32>
    %132 = vector.broadcast %131 : vector<1x256xf32> to vector<8x256xf32>
    %133 = arith.mulf %130, %132 : vector<8x256xf32>
    %c24_36 = arith.constant 24 : index
    %c0_37 = arith.constant 0 : index
    %134 = vector.load %arg4[%c24_36, %c0_37] : memref<72x256xf32, #tpu.memory_space<vmem>>, vector<8x256xf32>
    tpu.vector_store %arg4[%c24_36, %c0_37], %133 {strides = array<i32>} : memref<72x256xf32, #tpu.memory_space<vmem>>, vector<8x256xf32>,
    %c32_38 = arith.constant 32 : index
    %c0_39 = arith.constant 0 : index
    %135 = vector.load %arg4[%c32_38, %c0_39] : memref<72x256xf32, #tpu.memory_space<vmem>>, vector<8x256xf32>
    tpu.vector_store %arg4[%c32_38, %c0_39], %114 {strides = array<i32>} : memref<72x256xf32, #tpu.memory_space<vmem>>, vector<8x256xf32>,
    %c255_i32_40 = arith.constant 255 : i32
    %136 = tpu.dynamic_rotate %114 by %c255_i32_40 dim 1 : vector<8x256xf32>, i32 -> vector<8x256xf32>
    %137 = vector.extract_strided_slice %13 {offsets = [5, 0], sizes = [1, 256], strides = [1, 1]} : vector<16x256xf32> to vector<1x256xf32>
    %138 = vector.broadcast %137 : vector<1x256xf32> to vector<8x256xf32>
    %139 = arith.mulf %136, %138 : vector<8x256xf32>
    %c40_41 = arith.constant 40 : index
    %c0_42 = arith.constant 0 : index
    %140 = vector.load %arg4[%c40_41, %c0_42] : memref<72x256xf32, #tpu.memory_space<vmem>>, vector<8x256xf32>
    tpu.vector_store %arg4[%c40_41, %c0_42], %139 {strides = array<i32>} : memref<72x256xf32, #tpu.memory_space<vmem>>, vector<8x256xf32>,
    %c250_i32_43 = arith.constant 250 : i32
    %141 = tpu.dynamic_rotate %114 by %c250_i32_43 dim 1 : vector<8x256xf32>, i32 -> vector<8x256xf32>
    %142 = vector.extract_strided_slice %13 {offsets = [6, 0], sizes = [1, 256], strides = [1, 1]} : vector<16x256xf32> to vector<1x256xf32>
    %143 = vector.broadcast %142 : vector<1x256xf32> to vector<8x256xf32>
    %144 = arith.mulf %141, %143 : vector<8x256xf32>
    %c48_44 = arith.constant 48 : index
    %c0_45 = arith.constant 0 : index
    %145 = vector.load %arg4[%c48_44, %c0_45] : memref<72x256xf32, #tpu.memory_space<vmem>>, vector<8x256xf32>
    tpu.vector_store %arg4[%c48_44, %c0_45], %144 {strides = array<i32>} : memref<72x256xf32, #tpu.memory_space<vmem>>, vector<8x256xf32>,
    %c249_i32_46 = arith.constant 249 : i32
    %146 = tpu.dynamic_rotate %114 by %c249_i32_46 dim 1 : vector<8x256xf32>, i32 -> vector<8x256xf32>
    %147 = vector.extract_strided_slice %13 {offsets = [7, 0], sizes = [1, 256], strides = [1, 1]} : vector<16x256xf32> to vector<1x256xf32>
    %148 = vector.broadcast %147 : vector<1x256xf32> to vector<8x256xf32>
    %149 = arith.mulf %146, %148 : vector<8x256xf32>
    %c56_47 = arith.constant 56 : index
    %c0_48 = arith.constant 0 : index
    %150 = vector.load %arg4[%c56_47, %c0_48] : memref<72x256xf32, #tpu.memory_space<vmem>>, vector<8x256xf32>
    tpu.vector_store %arg4[%c56_47, %c0_48], %149 {strides = array<i32>} : memref<72x256xf32, #tpu.memory_space<vmem>>, vector<8x256xf32>,
    %c248_i32_49 = arith.constant 248 : i32
    %151 = tpu.dynamic_rotate %114 by %c248_i32_49 dim 1 : vector<8x256xf32>, i32 -> vector<8x256xf32>
    %152 = vector.extract_strided_slice %13 {offsets = [8, 0], sizes = [1, 256], strides = [1, 1]} : vector<16x256xf32> to vector<1x256xf32>
    %153 = vector.broadcast %152 : vector<1x256xf32> to vector<8x256xf32>
    %154 = arith.mulf %151, %153 : vector<8x256xf32>
    %c64_50 = arith.constant 64 : index
    %c0_51 = arith.constant 0 : index
    %155 = vector.load %arg4[%c64_50, %c0_51] : memref<72x256xf32, #tpu.memory_space<vmem>>, vector<8x256xf32>
    tpu.vector_store %arg4[%c64_50, %c0_51], %154 {strides = array<i32>} : memref<72x256xf32, #tpu.memory_space<vmem>>, vector<8x256xf32>,
    %c0_52 = arith.constant 0 : index
    %c0_53 = arith.constant 0 : index
    %156 = vector.load %arg4[%c0_52, %c0_53] : memref<72x256xf32, #tpu.memory_space<vmem>>, vector<72x256xf32>
    %cst_54 = arith.constant dense<0.000000e+00> : vector<8x256xf32>
    %157 = tpu.matmul %11, %156, %cst_54 {dimension_numbers = #tpu.dot_dimension_numbers<[1], [0], [0], [1], [0, 0, 1, 1], [], []>} : vector<8x72xf32>, vector<72x256xf32>, vector<8x256xf32> -> vector<8x256xf32>
    %158 = arith.addf %157, %9 : vector<8x256xf32>
    %159 = vector.extract_strided_slice %158 {offsets = [0, 0], sizes = [8, 128], strides = [1, 1]} : vector<8x256xf32> to vector<8x128xf32>
    %160 = vector.shape_cast %159 : vector<8x128xf32> to vector<1x8x128xf32>
    %cst_55 = arith.constant dense<0.000000e+00> : vector<1xf32>
    %161 = vector.multi_reduction <add>, %160, %cst_55 [1, 2] : vector<1x8x128xf32> to vector<1xf32>
    %162 = vector.shape_cast %161 : vector<1xf32> to vector<1x1x1xf32>
    %163 = vector.extract %162[0, 0, 0] : f32 from vector<1x1x1xf32>
    %164 = vector.broadcast %163 : f32 to vector<1x1xf32>
    %cst_56 = arith.constant 0.00297619053 : f32
    %165 = vector.broadcast %cst_56 : f32 to vector<1x1xf32>
    %166 = arith.mulf %164, %165 : vector<1x1xf32>
    %167 = arith.mulf %159, %159 : vector<8x128xf32>
    %168 = vector.shape_cast %167 : vector<8x128xf32> to vector<1x8x128xf32>
    %cst_57 = arith.constant dense<0.000000e+00> : vector<1xf32>
    %169 = vector.multi_reduction <add>, %168, %cst_57 [1, 2] : vector<1x8x128xf32> to vector<1xf32>
    %170 = vector.shape_cast %169 : vector<1xf32> to vector<1x1x1xf32>
    %171 = vector.extract %170[0, 0, 0] : f32 from vector<1x1x1xf32>
    %172 = vector.broadcast %171 : f32 to vector<1x1xf32>
    %cst_58 = arith.constant 0.00297619053 : f32
    %173 = vector.broadcast %cst_58 : f32 to vector<1x1xf32>
    %174 = arith.mulf %172, %173 : vector<1x1xf32>
    %175 = arith.mulf %166, %166 : vector<1x1xf32>
    %176 = arith.subf %174, %175 : vector<1x1xf32>
    %177 = vector.broadcast %166 : vector<1x1xf32> to vector<8x128xf32>
    %178 = arith.subf %159, %177 : vector<8x128xf32>
    %cst_59 = arith.constant 9.99999974E-6 : f32
    %179 = vector.broadcast %cst_59 : f32 to vector<1x1xf32>
    %180 = arith.addf %176, %179 : vector<1x1xf32>
    %181 = math.rsqrt %180 : vector<1x1xf32>
    %182 = vector.broadcast %181 : vector<1x1xf32> to vector<8x128xf32>
    %183 = arith.mulf %178, %182 : vector<8x128xf32>
    %184 = arith.mulf %183, %4 : vector<8x128xf32>
    %185 = arith.addf %184, %5 : vector<8x128xf32>
    %186 = vector.extract_strided_slice %158 {offsets = [0, 128], sizes = [8, 128], strides = [1, 1]} : vector<8x256xf32> to vector<8x128xf32>
    %187 = vector.shape_cast %186 : vector<8x128xf32> to vector<1x8x128xf32>
    %cst_60 = arith.constant dense<0.000000e+00> : vector<1xf32>
    %188 = vector.multi_reduction <add>, %187, %cst_60 [1, 2] : vector<1x8x128xf32> to vector<1xf32>
    %189 = vector.shape_cast %188 : vector<1xf32> to vector<1x1x1xf32>
    %190 = vector.extract %189[0, 0, 0] : f32 from vector<1x1x1xf32>
    %191 = vector.broadcast %190 : f32 to vector<1x1xf32>
    %cst_61 = arith.constant 0.00297619053 : f32
    %192 = vector.broadcast %cst_61 : f32 to vector<1x1xf32>
    %193 = arith.mulf %191, %192 : vector<1x1xf32>
    %194 = arith.mulf %186, %186 : vector<8x128xf32>
    %195 = vector.shape_cast %194 : vector<8x128xf32> to vector<1x8x128xf32>
    %cst_62 = arith.constant dense<0.000000e+00> : vector<1xf32>
    %196 = vector.multi_reduction <add>, %195, %cst_62 [1, 2] : vector<1x8x128xf32> to vector<1xf32>
    %197 = vector.shape_cast %196 : vector<1xf32> to vector<1x1x1xf32>
    %198 = vector.extract %197[0, 0, 0] : f32 from vector<1x1x1xf32>
    %199 = vector.broadcast %198 : f32 to vector<1x1xf32>
    %cst_63 = arith.constant 0.00297619053 : f32
    %200 = vector.broadcast %cst_63 : f32 to vector<1x1xf32>
    %201 = arith.mulf %199, %200 : vector<1x1xf32>
    %202 = arith.mulf %193, %193 : vector<1x1xf32>
    %203 = arith.subf %201, %202 : vector<1x1xf32>
    %204 = vector.broadcast %193 : vector<1x1xf32> to vector<8x128xf32>
    %205 = arith.subf %186, %204 : vector<8x128xf32>
    %cst_64 = arith.constant 9.99999974E-6 : f32
    %206 = vector.broadcast %cst_64 : f32 to vector<1x1xf32>
    %207 = arith.addf %203, %206 : vector<1x1xf32>
    %208 = math.rsqrt %207 : vector<1x1xf32>
    %209 = vector.broadcast %208 : vector<1x1xf32> to vector<8x128xf32>
    %210 = arith.mulf %205, %209 : vector<8x128xf32>
    %211 = arith.mulf %210, %4 : vector<8x128xf32>
    %212 = arith.addf %211, %5 : vector<8x128xf32>
    %213 = tpu.concatenate %185, %212 in 1 : vector<8x128xf32>, vector<8x128xf32> -> vector<8x256xf32>
    %214 = arith.addf %213, %0 : vector<8x256xf32>
    %cst_65 = arith.constant 0.000000e+00 : f32
    %215 = vector.broadcast %cst_65 : f32 to vector<8x256xf32>
    %216 = arith.maximumf %214, %215 : vector<8x256xf32>
    %c0_66 = arith.constant 0 : index
    %c0_67 = arith.constant 0 : index
    %217 = vector.load %arg3[%c0_66, %c0_67] : memref<8x256xf32, #tpu.memory_space<vmem>>, vector<8x256xf32>
    tpu.vector_store %arg3[%c0_66, %c0_67], %216 {strides = array<i32>} : memref<8x256xf32, #tpu.memory_space<vmem>>, vector<8x256xf32>,
    return
  }
  func.func @transform_0(%arg0: i32) -> (i32, i32) {
    %c0_i32 = arith.constant 0 : i32
    %c0_i32_0 = arith.constant 0 : i32
    %c0_i32_1 = arith.constant 0 : i32
    return %c0_i32, %c0_i32_0 : i32, i32
  }
  func.func @transform_1(%arg0: i32) -> (i32, i32) {
    %c0_i32 = arith.constant 0 : i32
    %c0_i32_0 = arith.constant 0 : i32
    %c0_i32_1 = arith.constant 0 : i32
    return %c0_i32, %c0_i32_0 : i32, i32
  }
  func.func @transform_2(%arg0: i32) -> (i32, i32) {
    %c0_i32 = arith.constant 0 : i32
    %c0_i32_0 = arith.constant 0 : i32
    %c0_i32_1 = arith.constant 0 : i32
    return %c0_i32, %c0_i32_0 : i32, i32
  }
}

</mosaic_0001>

<llo_original>
// kernel: resblock_pallas_packed.1
$region0: #{resblock_pallas_packed.1}
  #allocation0 [shape = 'u32[]', space=smem, size = 0x4, offset = 0x4, fixed_abs, tag = 'smem constant byte address 0x4 - core index']
  #allocation1 [shape = 'u32[144,128]{1,0:T(1,128)}', space=vmem, size = 0x12000, scoped, tag = 'internal scratch']
  #allocation2 [shape = 'f32[72,256]{1,0:T(8,128)}', space=vmem, size = 0x12000, scoped, tag = 'scratch operand']
  %s0 = inlined_call_operand.hbm [shape: f32[8,256], index: 0, kind: input, shape index: {}]
  %s1 = inlined_call_operand.hbm [shape: f32[80,128], index: 1, kind: input, shape index: {}]
  %s2 = inlined_call_operand.hbm [shape: f32[8,256], index: 2, kind: output, shape index: {}]
  %s3 = sld [smem:[#allocation0]]
  $region26: #{resblock_pallas_packed.1} parent=0
    _
  %s5 = ssub.s32 1, %s3
  %s6 = scalar_select 0, %s5, %s3
  $region1: #{resblock_pallas_packed.1} parent=0
    #allocation3 [shape = 'u8[8192]{0}', space=vmem, size = 0x2000, scoped, tag = 'input window, operand 0, single buffered']
    #allocation4 [shape = 's32[1]{0}', space=sflag, size = 0x4, scoped, tag = 'scoped memory for resblock_pallas_packed.1']
    #allocation5 [shape = 's32[1]{0}', space=sflag, size = 0x4, scoped, tag = 'scoped memory for resblock_pallas_packed.1']
    #allocation6 [shape = 'u8[40960]{0}', space=vmem, size = 0xa000, scoped, tag = 'input window, operand 1, single buffered']
    #allocation7 [shape = 's32[1]{0}', space=sflag, size = 0x4, scoped, tag = 'scoped memory for resblock_pallas_packed.1']
    #allocation8 [shape = 'u8[8192]{0}', space=vmem, size = 0x2000, scoped, tag = 'output window, operand 0, single buffered']
    %7 = vsyncpa [#allocation4], 0
    %8 = vsyncpa [#allocation7], 0
    %9 = vsyncpa [#allocation5], 0
    // Predicated region
    $region2: #{resblock_pallas_packed.1} parent=1 // pred_check
      _
    $region3: #{resblock_pallas_packed.1} parent=1 // pred_check_branch
      %11 = sbr.rel (0) target = $region5
    $region4: #{resblock_pallas_packed.1} parent=1 // pred_region
      %s13 = ssub.s32 256, 256
      %14 = vsyncadd [#allocation4], %s13
      %s16 = sshll.u32 [#allocation3], 4
      %s17 = int_to_ptr.vmem [resolvable:$true] %s16
      %19 = dma.hbm_to_vmem [thread:$0]  %s0, 256, %s17, [#allocation4]
    $region5: #{resblock_pallas_packed.1} parent=1 // pred_fallthru
      _
    // Predicated region
    $region6: #{resblock_pallas_packed.1} parent=1 // pred_check
      _
    $region7: #{resblock_pallas_packed.1} parent=1 // pred_check_branch
      %21 = sbr.rel (0) target = $region9
    $region8: #{resblock_pallas_packed.1} parent=1 // pred_region
      %s23 = ssub.s32 1280, 1280
      %24 = vsyncadd [#allocation7], %s23
      %s25 = sshll.u32 [#allocation6], 4
      %s26 = int_to_ptr.vmem [resolvable:$true] %s25
      %31 = dma.hbm_to_vmem [thread:$0]  %s1, 1280, %s26, [#allocation7], 128, 128, 8
    $region9: #{resblock_pallas_packed.1} parent=1 // pred_fallthru
      _
    // Predicated region
    $region10: #{resblock_pallas_packed.1} parent=1 // pred_check
      _
    $region11: #{resblock_pallas_packed.1} parent=1 // pred_check_branch
      %33 = sbr.rel (0) target = $region13
    $region12: #{resblock_pallas_packed.1} parent=1 // pred_region
      %34 = dma.done [#allocation4], 256
    $region13: #{resblock_pallas_packed.1} parent=1 // pred_fallthru
      _
    // Predicated region
    $region14: #{resblock_pallas_packed.1} parent=1 // pred_check
      _
    $region15: #{resblock_pallas_packed.1} parent=1 // pred_check_branch
      %36 = sbr.rel (0) target = $region17
    $region16: #{resblock_pallas_packed.1} parent=1 // pred_region
      %37 = dma.done [#allocation7], 1280
    $region17: #{resblock_pallas_packed.1} parent=1 // pred_fallthru
      _
    %v38 = vld [vmem:[#allocation3] sm:$0xff]
    %v39 = vld [vmem:[#allocation3 + $0x8] sm:$0xff]
    %v40 = vld [vmem:[#allocation6] sm:$0xff]
    %v41 = vld [vmem:[#allocation6 + $0x8] sm:$0xff]
    %v42 = vld [vmem:[#allocation6 + $0x10] sm:$0xff]
    %v43 = vld [vmem:[#allocation6 + $0x18] sm:$0xff]
    %v44 = vld [vmem:[#allocation6 + $0x20] sm:$0xff]
    %v45 = vld [vmem:[#allocation6 + $0x28] sm:$0xff]
    %v46 = vld [vmem:[#allocation6 + $0x30] sm:$0xff]
    %v47 = vld [vmem:[#allocation6 + $0x38] sm:$0xff]
    %v48 = vld [vmem:[#allocation6 + $0x40] sm:$0xff]
    %v49 = vld [vmem:[#allocation6 + $0x48] sm:$0xff]
    %50 = vrot.lane.b32.xlu0 %v38, 8
    %v51 = vpop.permute.xlu0 %50
    %52 = vrot.lane.b32.xlu0 %v39, 8
    %v53 = vpop.permute.xlu0 %52
    %v54 = vlaneseq
    %v55 = vand.u32 %v54, 127
    %vm56 = vcmp.lt.s32.totalorder %v55, 8
    %v57 = vsel %vm56, %v51, %v53
    %v58 = vsel %vm56, %v53, %v51
    %v59 = vlaneseq
    %v60 = vshrl.u32 %v59, 7
    %v61 = vsub.s32 0, %v60
    %v62 = vrot.slane %v48, %v61
    %v63 = vmul.f32 %v58, %v62
    %v64 = vmul.f32 %v57, %v62
    %65 = vst [vmem:[#allocation2] sm:$0xff] %v63
    %66 = vst [vmem:[#allocation2 + $0x8] sm:$0xff] %v64
    %67 = vrot.lane.b32.xlu0 %v38, 7
    %v68 = vpop.permute.xlu0 %67
    %69 = vrot.lane.b32.xlu0 %v39, 7
    %v70 = vpop.permute.xlu0 %69
    %vm71 = vcmp.lt.s32.totalorder %v55, 7
    %v72 = vsel %vm71, %v68, %v70
    %v73 = vsel %vm71, %v70, %v68
    %v74 = vlaneseq
    %v75 = vshrl.u32 %v74, 7
    %v76 = vsub.s32 1, %v75
    %v77 = vrot.slane %v48, %v76
    %v78 = vmul.f32 %v73, %v77
    %v79 = vmul.f32 %v72, %v77
    %80 = vst [vmem:[#allocation2 + $0x10] sm:$0xff] %v78
    %81 = vst [vmem:[#allocation2 + $0x18] sm:$0xff] %v79
    %82 = vrot.lane.b32.xlu0 %v38, 6
    %v83 = vpop.permute.xlu0 %82
    %84 = vrot.lane.b32.xlu0 %v39, 6
    %v85 = vpop.permute.xlu0 %84
    %vm86 = vcmp.lt.s32.totalorder %v55, 6
    %v87 = vsel %vm86, %v83, %v85
    %v88 = vsel %vm86, %v85, %v83
    %v89 = vlaneseq
    %v90 = vshrl.u32 %v89, 7
    %v91 = vsub.s32 2, %v90
    %v92 = vrot.slane %v48, %v91
    %v93 = vmul.f32 %v88, %v92
    %v94 = vmul.f32 %v87, %v92
    %95 = vst [vmem:[#allocation2 + $0x20] sm:$0xff] %v93
    %96 = vst [vmem:[#allocation2 + $0x28] sm:$0xff] %v94
    %97 = vrot.lane.b32.xlu0 %v38, 1
    %v98 = vpop.permute.xlu0 %97
    %99 = vrot.lane.b32.xlu0 %v39, 1
    %v100 = vpop.permute.xlu0 %99
    %vm101 = vcmp.lt.s32.totalorder %v55, 1
    %v102 = vsel %vm101, %v98, %v100
    %v103 = vsel %vm101, %v100, %v98
    %v104 = vlaneseq
    %v105 = vshrl.u32 %v104, 7
    %v106 = vsub.s32 3, %v105
    %v107 = vrot.slane %v48, %v106
    %v108 = vmul.f32 %v103, %v107
    %v109 = vmul.f32 %v102, %v107
    %110 = vst [vmem:[#allocation2 + $0x30] sm:$0xff] %v108
    %111 = vst [vmem:[#allocation2 + $0x38] sm:$0xff] %v109
    %112 = vst [vmem:[#allocation2 + $0x40] sm:$0xff] %v38
    %113 = vst [vmem:[#allocation2 + $0x48] sm:$0xff] %v39
    %114 = vrot.lane.b32.xlu0 %v38, 127
    %v115 = vpop.permute.xlu0 %114
    %116 = vrot.lane.b32.xlu0 %v39, 127
    %v117 = vpop.permute.xlu0 %116
    %vm118 = vcmp.lt.s32.totalorder %v55, 127
    %v119 = vsel %vm118, %v115, %v117
    %v120 = vsel %vm118, %v117, %v115
    %v121 = vlaneseq
    %v122 = vshrl.u32 %v121, 7
    %v123 = vsub.s32 5, %v122
    %v124 = vrot.slane %v48, %v123
    %v125 = vmul.f32 %v119, %v124
    %v126 = vmul.f32 %v120, %v124
    %127 = vst [vmem:[#allocation2 + $0x50] sm:$0xff] %v125
    %128 = vst [vmem:[#allocation2 + $0x58] sm:$0xff] %v126
    %129 = vrot.lane.b32.xlu0 %v38, 122
    %v130 = vpop.permute.xlu0 %129
    %131 = vrot.lane.b32.xlu0 %v39, 122
    %v132 = vpop.permute.xlu0 %131
    %vm133 = vcmp.lt.s32.totalorder %v55, 122
    %v134 = vsel %vm133, %v130, %v132
    %v135 = vsel %vm133, %v132, %v130
    %v136 = vlaneseq
    %v137 = vshrl.u32 %v136, 7
    %v138 = vsub.s32 6, %v137
    %v139 = vrot.slane %v48, %v138
    %v140 = vmul.f32 %v134, %v139
    %v141 = vmul.f32 %v135, %v139
    %142 = vst [vmem:[#allocation2 + $0x60] sm:$0xff] %v140
    %143 = vst [vmem:[#allocation2 + $0x68] sm:$0xff] %v141
    %144 = vrot.lane.b32.xlu0 %v38, 121
    %v145 = vpop.permute.xlu0 %144
    %146 = vrot.lane.b32.xlu0 %v39, 121
    %v147 = vpop.permute.xlu0 %146
    %vm148 = vcmp.lt.s32.totalorder %v55, 121
    %v149 = vsel %vm148, %v145, %v147
    %v150 = vsel %vm148, %v147, %v145
    %v151 = vlaneseq
    %v152 = vshrl.u32 %v151, 7
    %v153 = vsub.s32 7, %v152
    %v154 = vrot.slane %v48, %v153
    %v155 = vmul.f32 %v149, %v154
    %v156 = vmul.f32 %v150, %v154
    %157 = vst [vmem:[#allocation2 + $0x70] sm:$0xff] %v155
    %158 = vst [vmem:[#allocation2 + $0x78] sm:$0xff] %v156
    %159 = vrot.lane.b32.xlu0 %v38, 120
    %v160 = vpop.permute.xlu0 %159
    %161 = vrot.lane.b32.xlu0 %v39, 120
    %v162 = vpop.permute.xlu0 %161
    %vm163 = vcmp.lt.s32.totalorder %v55, 120
    %v164 = vsel %vm163, %v160, %v162
    %v165 = vsel %vm163, %v162, %v160
    %v166 = vlaneseq
    %v167 = vshrl.u32 %v166, 7
    %v168 = vsub.s32 0, %v167
    %v169 = vrot.slane %v49, %v168
    %v170 = vmul.f32 %v164, %v169
    %v171 = vmul.f32 %v165, %v169
    %172 = vst [vmem:[#allocation2 + $0x80] sm:$0xff] %v170
    %173 = vst [vmem:[#allocation2 + $0x88] sm:$0xff] %v171
    %v174 = vld [vmem:[#allocation2] sm:$0xff]
    %v175 = vld [vmem:[#allocation2 + $0x8] sm:$0xff]
    %v176 = vld [vmem:[#allocation2 + $0x10] sm:$0xff]
    %v177 = vld [vmem:[#allocation2 + $0x18] sm:$0xff]
    %v178 = vld [vmem:[#allocation2 + $0x20] sm:$0xff]
    %v179 = vld [vmem:[#allocation2 + $0x28] sm:$0xff]
    %v180 = vld [vmem:[#allocation2 + $0x30] sm:$0xff]
    %v181 = vld [vmem:[#allocation2 + $0x38] sm:$0xff]
    %v182 = vld [vmem:[#allocation2 + $0x40] sm:$0xff]
    %v183 = vld [vmem:[#allocation2 + $0x48] sm:$0xff]
    %v184 = vld [vmem:[#allocation2 + $0x50] sm:$0xff]
    %v185 = vld [vmem:[#allocation2 + $0x58] sm:$0xff]
    %v186 = vld [vmem:[#allocation2 + $0x60] sm:$0xff]
    %v187 = vld [vmem:[#allocation2 + $0x68] sm:$0xff]
    %v188 = vld [vmem:[#allocation2 + $0x70] sm:$0xff]
    %v189 = vld [vmem:[#allocation2 + $0x78] sm:$0xff]
    %v190 = vld [vmem:[#allocation2 + $0x80] sm:$0xff]
    %v191 = vld [vmem:[#allocation2 + $0x88] sm:$0xff]
    %vm192 = vcmask 588800
    %v194 = vsel %vm192, %v46, 0
    %196 = vmatprep.subr.mxu0 %v175
    %197 = vmatpush1.msra.mxu0 %v174
    %198 = vmatprep.subr.mxu0 %v177
    %199 = vmatpush1.msra.mxu0 %v176
    %200 = vmatprep.subr.mxu0 %v179
    %201 = vmatpush1.msra.mxu0 %v178
    %202 = vmatprep.subr.mxu0 %v181
    %203 = vmatpush1.msra.mxu0 %v180
    %204 = vmatprep.subr.mxu0 %v183
    %205 = vmatpush1.msra.mxu0 %v182
    %206 = vmatprep.subr.mxu0 %v185
    %207 = vmatpush1.msra.mxu0 %v184
    %208 = vmatprep.subr.mxu0 %v187
    %209 = vmatpush1.msra.mxu0 %v186
    %210 = vmatprep.subr.mxu0 %v189
    %211 = vmatpush1.msra.mxu0 %v188
    %212 = vmatprep.subr.mxu0 %v191
    %213 = vmatpush1.msra.mxu0 %v190
    %214 = vmatprep.subr.mxu0 0.0
    %215 = vmatpush1.msra.mxu0 0.0
    %216 = vmatprep.subr.mxu0 0.0
    %217 = vmatpush1.msra.mxu0 0.0
    %218 = vmatprep.subr.mxu0 0.0
    %219 = vmatpush1.msra.mxu0 0.0
    %220 = vmatprep.subr.mxu0 0.0
    %221 = vmatpush1.msra.mxu0 0.0
    %222 = vmatprep.subr.mxu0 0.0
    %223 = vmatpush1.msra.mxu0 0.0
    %224 = vmatprep.subr.mxu0 0.0
    %225 = vmatpush1.msra.mxu0 0.0
    %226 = vmatprep.subr.mxu0 0.0
    %227 = vmatpush1.msra.mxu0 0.0
    %228 = vmatprep.subr.mxu0 0.0
    %229 = vmatpush1.msra.mxu0 0.0
    %230 = vmatprep.subr.mxu0 0.0
    %231 = vmatpush1.msra.mxu0 0.0
    %232 = vmatprep.subr.mxu0 0.0
    %233 = vmatpush1.msra.mxu0 0.0
    %234 = vmatprep.subr.mxu0 0.0
    %235 = vmatpush1.msra.mxu0 0.0
    %236 = vmatprep.subr.mxu0 0.0
    %237 = vmatpush1.msra.mxu0 0.0
    %238 = vmatprep.subr.mxu0 0.0
    %239 = vmatpush1.msra.mxu0 0.0
    %240 = vmatprep.subr.mxu0 0.0
    %241 = vmatpush1.msra.mxu0 0.0
    %242 = vmatprep.subr.mxu0 0.0
    %243 = vmatpush1.msra.mxu0 0.0
    %244 = vmatprep.subr.mxu0 0.0
    %245 = vmatpush1.msra.mxu0 0.0
    %246 = vmatprep.subr.mxu0 0.0
    %247 = vmatpush1.msra.mxu0 0.0
    %248 = vmatprep.subr.mxu0 0.0
    %249 = vmatpush1.msra.mxu0 0.0
    %250 = vmatprep.subr.mxu0 0.0
    %251 = vmatpush1.msra.mxu0 0.0
    %252 = vmatprep.subr.mxu0 0.0
    %253 = vmatpush1.msra.mxu0 0.0
    %254 = vmatprep.subr.mxu0 0.0
    %255 = vmatpush1.msra.mxu0 0.0
    %256 = vmatprep.subr.mxu0 0.0
    %257 = vmatpush1.msra.mxu0 0.0
    %258 = vmatprep.subr.mxu0 0.0
    %259 = vmatpush1.msra.mxu0 0.0
    %260 = vmatprep.mubr.f32.mxu0 0.0
    %261 = vmatmul.mubr.f32.gmra.mrb[0].mxu0 %v194
    %v262 = vpop.f32.mrb[0].mxu0
    %v263 = vadd.f32 %v44, %v262
    %v264 = vpop.f32.mrb[0].mxu0
    %v265 = vadd.f32 %v44, %v264
    %266 = vdwg.mxu0
    %267 = vadd.xlane.f32.xlu0 %v263
    %v268 = vpop.xlane.xlu0 %267
    %v269 = vrot.slane %v268, 4
    %v270 = vadd.f32 %v268, %v269
    %v271 = vrot.slane %v270, 2
    %v272 = vadd.f32 %v270, %v271
    %v273 = vrot.slane %v272, 1
    %v274 = vadd.f32 %v272, %v273
    %s275 = vtos %v274
    %v276 = vstv %s275
    %v277 = vmul.f32 %v276, 0.0029761905
    %v278 = vmul.f32 %v263, %v263
    %279 = vadd.xlane.f32.xlu0 %v278
    %v280 = vpop.xlane.xlu0 %279
    %v281 = vrot.slane %v280, 4
    %v282 = vadd.f32 %v280, %v281
    %v283 = vrot.slane %v282, 2
    %v284 = vadd.f32 %v282, %v283
    %v285 = vrot.slane %v284, 1
    %v286 = vadd.f32 %v284, %v285
    %s287 = vtos %v286
    %v288 = vstv %s287
    %v289 = vmul.f32 %v288, 0.0029761905
    %v290 = vmul.f32 %v277, %v277
    %v291 = vsub.f32 %v289, %v290
    %v292 = vsub.f32 %v263, %v277
    %v293 = vadd.f32 %v291, 1e-05
    %v294 = vrsqrt.pop %v293
    %v295 = vmul.f32 %v292, %v294
    %v296 = vmul.f32 %v295, %v40
    %v297 = vadd.f32 %v296, %v41
    %298 = vadd.xlane.f32.xlu0 %v265
    %v299 = vpop.xlane.xlu0 %298
    %v300 = vrot.slane %v299, 4
    %v301 = vadd.f32 %v299, %v300
    %v302 = vrot.slane %v301, 2
    %v303 = vadd.f32 %v301, %v302
    %v304 = vrot.slane %v303, 1
    %v305 = vadd.f32 %v303, %v304
    %s306 = vtos %v305
    %v307 = vstv %s306
    %v308 = vmul.f32 %v307, 0.0029761905
    %v309 = vmul.f32 %v265, %v265
    %310 = vadd.xlane.f32.xlu0 %v309
    %v311 = vpop.xlane.xlu0 %310
    %v312 = vrot.slane %v311, 4
    %v313 = vadd.f32 %v311, %v312
    %v314 = vrot.slane %v313, 2
    %v315 = vadd.f32 %v313, %v314
    %v316 = vrot.slane %v315, 1
    %v317 = vadd.f32 %v315, %v316
    %s318 = vtos %v317
    %v319 = vstv %s318
    %v320 = vmul.f32 %v319, 0.0029761905
    %v321 = vmul.f32 %v308, %v308
    %v322 = vsub.f32 %v320, %v321
    %v323 = vsub.f32 %v265, %v308
    %v324 = vadd.f32 %v322, 1e-05
    %v325 = vrsqrt.pop %v324
    %v326 = vmul.f32 %v323, %v325
    %v327 = vmul.f32 %v326, %v40
    %v328 = vadd.f32 %v327, %v41
    %v329 = vmax.f32 %v297, 0.0
    %v330 = vmax.f32 %v328, 0.0
    %331 = vrot.lane.b32.xlu0 %v329, 8
    %v332 = vpop.permute.xlu0 %331
    %333 = vrot.lane.b32.xlu0 %v330, 8
    %v334 = vpop.permute.xlu0 %333
    %v335 = vsel %vm56, %v332, %v334
    %v336 = vsel %vm56, %v334, %v332
    %v337 = vmul.f32 %v336, %v62
    %v338 = vmul.f32 %v335, %v62
    %339 = vst [vmem:[#allocation2] sm:$0xff] %v337
    %340 = vst [vmem:[#allocation2 + $0x8] sm:$0xff] %v338
    %341 = vrot.lane.b32.xlu0 %v329, 7
    %v342 = vpop.permute.xlu0 %341
    %343 = vrot.lane.b32.xlu0 %v330, 7
    %v344 = vpop.permute.xlu0 %343
    %v345 = vsel %vm71, %v342, %v344
    %v346 = vsel %vm71, %v344, %v342
    %v347 = vmul.f32 %v346, %v77
    %v348 = vmul.f32 %v345, %v77
    %349 = vst [vmem:[#allocation2 + $0x10] sm:$0xff] %v347
    %350 = vst [vmem:[#allocation2 + $0x18] sm:$0xff] %v348
    %351 = vrot.lane.b32.xlu0 %v329, 6
    %v352 = vpop.permute.xlu0 %351
    %353 = vrot.lane.b32.xlu0 %v330, 6
    %v354 = vpop.permute.xlu0 %353
    %v355 = vsel %vm86, %v352, %v354
    %v356 = vsel %vm86, %v354, %v352
    %v357 = vmul.f32 %v356, %v92
    %v358 = vmul.f32 %v355, %v92
    %359 = vst [vmem:[#allocation2 + $0x20] sm:$0xff] %v357
    %360 = vst [vmem:[#allocation2 + $0x28] sm:$0xff] %v358
    %361 = vrot.lane.b32.xlu0 %v329, 1
    %v362 = vpop.permute.xlu0 %361
    %363 = vrot.lane.b32.xlu0 %v330, 1
    %v364 = vpop.permute.xlu0 %363
    %v365 = vsel %vm101, %v362, %v364
    %v366 = vsel %vm101, %v364, %v362
    %v367 = vmul.f32 %v366, %v107
    %v368 = vmul.f32 %v365, %v107
    %369 = vst [vmem:[#allocation2 + $0x30] sm:$0xff] %v367
    %370 = vst [vmem:[#allocation2 + $0x38] sm:$0xff] %v368
    %371 = vst [vmem:[#allocation2 + $0x40] sm:$0xff] %v329
    %372 = vst [vmem:[#allocation2 + $0x48] sm:$0xff] %v330
    %373 = vrot.lane.b32.xlu0 %v329, 127
    %v374 = vpop.permute.xlu0 %373
    %375 = vrot.lane.b32.xlu0 %v330, 127
    %v376 = vpop.permute.xlu0 %375
    %v377 = vsel %vm118, %v374, %v376
    %v378 = vsel %vm118, %v376, %v374
    %v379 = vmul.f32 %v377, %v124
    %v380 = vmul.f32 %v378, %v124
    %381 = vst [vmem:[#allocation2 + $0x50] sm:$0xff] %v379
    %382 = vst [vmem:[#allocation2 + $0x58] sm:$0xff] %v380
    %383 = vrot.lane.b32.xlu0 %v329, 122
    %v384 = vpop.permute.xlu0 %383
    %385 = vrot.lane.b32.xlu0 %v330, 122
    %v386 = vpop.permute.xlu0 %385
    %v387 = vsel %vm133, %v384, %v386
    %v388 = vsel %vm133, %v386, %v384
    %v389 = vmul.f32 %v387, %v139
    %v390 = vmul.f32 %v388, %v139
    %391 = vst [vmem:[#allocation2 + $0x60] sm:$0xff] %v389
    %392 = vst [vmem:[#allocation2 + $0x68] sm:$0xff] %v390
    %393 = vrot.lane.b32.xlu0 %v329, 121
    %v394 = vpop.permute.xlu0 %393
    %395 = vrot.lane.b32.xlu0 %v330, 121
    %v396 = vpop.permute.xlu0 %395
    %v397 = vsel %vm148, %v394, %v396
    %v398 = vsel %vm148, %v396, %v394
    %v399 = vmul.f32 %v397, %v154
    %v400 = vmul.f32 %v398, %v154
    %401 = vst [vmem:[#allocation2 + $0x70] sm:$0xff] %v399
    %402 = vst [vmem:[#allocation2 + $0x78] sm:$0xff] %v400
    %403 = vrot.lane.b32.xlu0 %v329, 120
    %v404 = vpop.permute.xlu0 %403
    %405 = vrot.lane.b32.xlu0 %v330, 120
    %v406 = vpop.permute.xlu0 %405
    %v407 = vsel %vm163, %v404, %v406
    %v408 = vsel %vm163, %v406, %v404
    %v409 = vmul.f32 %v407, %v169
    %v410 = vmul.f32 %v408, %v169
    %411 = vst [vmem:[#allocation2 + $0x80] sm:$0xff] %v409
    %412 = vst [vmem:[#allocation2 + $0x88] sm:$0xff] %v410
    %v413 = vld [vmem:[#allocation2] sm:$0xff]
    %v414 = vld [vmem:[#allocation2 + $0x8] sm:$0xff]
    %v415 = vld [vmem:[#allocation2 + $0x10] sm:$0xff]
    %v416 = vld [vmem:[#allocation2 + $0x18] sm:$0xff]
    %v417 = vld [vmem:[#allocation2 + $0x20] sm:$0xff]
    %v418 = vld [vmem:[#allocation2 + $0x28] sm:$0xff]
    %v419 = vld [vmem:[#allocation2 + $0x30] sm:$0xff]
    %v420 = vld [vmem:[#allocation2 + $0x38] sm:$0xff]
    %v421 = vld [vmem:[#allocation2 + $0x40] sm:$0xff]
    %v422 = vld [vmem:[#allocation2 + $0x48] sm:$0xff]
    %v423 = vld [vmem:[#allocation2 + $0x50] sm:$0xff]
    %v424 = vld [vmem:[#allocation2 + $0x58] sm:$0xff]
    %v425 = vld [vmem:[#allocation2 + $0x60] sm:$0xff]
    %v426 = vld [vmem:[#allocation2 + $0x68] sm:$0xff]
    %v427 = vld [vmem:[#allocation2 + $0x70] sm:$0xff]
    %v428 = vld [vmem:[#allocation2 + $0x78] sm:$0xff]
    %v429 = vld [vmem:[#allocation2 + $0x80] sm:$0xff]
    %v430 = vld [vmem:[#allocation2 + $0x88] sm:$0xff]
    %v432 = vsel %vm192, %v47, 0
    %434 = vmatprep.subr.mxu0 %v414
    %435 = vmatpush1.msra.mxu0 %v413
    %436 = vmatprep.subr.mxu0 %v416
    %437 = vmatpush1.msra.mxu0 %v415
    %438 = vmatprep.subr.mxu0 %v418
    %439 = vmatpush1.msra.mxu0 %v417
    %440 = vmatprep.subr.mxu0 %v420
    %441 = vmatpush1.msra.mxu0 %v419
    %442 = vmatprep.subr.mxu0 %v422
    %443 = vmatpush1.msra.mxu0 %v421
    %444 = vmatprep.subr.mxu0 %v424
    %445 = vmatpush1.msra.mxu0 %v423
    %446 = vmatprep.subr.mxu0 %v426
    %447 = vmatpush1.msra.mxu0 %v425
    %448 = vmatprep.subr.mxu0 %v428
    %449 = vmatpush1.msra.mxu0 %v427
    %450 = vmatprep.subr.mxu0 %v430
    %451 = vmatpush1.msra.mxu0 %v429
    %452 = vmatprep.subr.mxu0 0.0
    %453 = vmatpush1.msra.mxu0 0.0
    %454 = vmatprep.subr.mxu0 0.0
    %455 = vmatpush1.msra.mxu0 0.0
    %456 = vmatprep.subr.mxu0 0.0
    %457 = vmatpush1.msra.mxu0 0.0
    %458 = vmatprep.subr.mxu0 0.0
    %459 = vmatpush1.msra.mxu0 0.0
    %460 = vmatprep.subr.mxu0 0.0
    %461 = vmatpush1.msra.mxu0 0.0
    %462 = vmatprep.subr.mxu0 0.0
    %463 = vmatpush1.msra.mxu0 0.0
    %464 = vmatprep.subr.mxu0 0.0
    %465 = vmatpush1.msra.mxu0 0.0
    %466 = vmatprep.subr.mxu0 0.0
    %467 = vmatpush1.msra.mxu0 0.0
    %468 = vmatprep.subr.mxu0 0.0
    %469 = vmatpush1.msra.mxu0 0.0
    %470 = vmatprep.subr.mxu0 0.0
    %471 = vmatpush1.msra.mxu0 0.0
    %472 = vmatprep.subr.mxu0 0.0
    %473 = vmatpush1.msra.mxu0 0.0
    %474 = vmatprep.subr.mxu0 0.0
    %475 = vmatpush1.msra.mxu0 0.0
    %476 = vmatprep.subr.mxu0 0.0
    %477 = vmatpush1.msra.mxu0 0.0
    %478 = vmatprep.subr.mxu0 0.0
    %479 = vmatpush1.msra.mxu0 0.0
    %480 = vmatprep.subr.mxu0 0.0
    %481 = vmatpush1.msra.mxu0 0.0
    %482 = vmatprep.subr.mxu0 0.0
    %483 = vmatpush1.msra.mxu0 0.0
    %484 = vmatprep.subr.mxu0 0.0
    %485 = vmatpush1.msra.mxu0 0.0
    %486 = vmatprep.subr.mxu0 0.0
    %487 = vmatpush1.msra.mxu0 0.0
    %488 = vmatprep.subr.mxu0 0.0
    %489 = vmatpush1.msra.mxu0 0.0
    %490 = vmatprep.subr.mxu0 0.0
    %491 = vmatpush1.msra.mxu0 0.0
    %492 = vmatprep.subr.mxu0 0.0
    %493 = vmatpush1.msra.mxu0 0.0
    %494 = vmatprep.subr.mxu0 0.0
    %495 = vmatpush1.msra.mxu0 0.0
    %496 = vmatprep.subr.mxu0 0.0
    %497 = vmatpush1.msra.mxu0 0.0
    %498 = vmatprep.mubr.f32.mxu0 0.0
    %499 = vmatmul.mubr.f32.gmra.mrb[0].mxu0 %v432
    %v500 = vpop.f32.mrb[0].mxu0
    %v501 = vadd.f32 %v45, %v500
    %v502 = vpop.f32.mrb[0].mxu0
    %v503 = vadd.f32 %v45, %v502
    %504 = vdwg.mxu0
    %505 = vadd.xlane.f32.xlu0 %v501
    %v506 = vpop.xlane.xlu0 %505
    %v507 = vrot.slane %v506, 4
    %v508 = vadd.f32 %v506, %v507
    %v509 = vrot.slane %v508, 2
    %v510 = vadd.f32 %v508, %v509
    %v511 = vrot.slane %v510, 1
    %v512 = vadd.f32 %v510, %v511
    %s513 = vtos %v512
    %v514 = vstv %s513
    %v515 = vmul.f32 %v514, 0.0029761905
    %v516 = vmul.f32 %v501, %v501
    %517 = vadd.xlane.f32.xlu0 %v516
    %v518 = vpop.xlane.xlu0 %517
    %v519 = vrot.slane %v518, 4
    %v520 = vadd.f32 %v518, %v519
    %v521 = vrot.slane %v520, 2
    %v522 = vadd.f32 %v520, %v521
    %v523 = vrot.slane %v522, 1
    %v524 = vadd.f32 %v522, %v523
    %s525 = vtos %v524
    %v526 = vstv %s525
    %v527 = vmul.f32 %v526, 0.0029761905
    %v528 = vmul.f32 %v515, %v515
    %v529 = vsub.f32 %v527, %v528
    %v530 = vsub.f32 %v501, %v515
    %v531 = vadd.f32 %v529, 1e-05
    %v532 = vrsqrt.pop %v531
    %v533 = vmul.f32 %v530, %v532
    %v534 = vmul.f32 %v533, %v42
    %v535 = vadd.f32 %v534, %v43
    %536 = vadd.xlane.f32.xlu0 %v503
    %v537 = vpop.xlane.xlu0 %536
    %v538 = vrot.slane %v537, 4
    %v539 = vadd.f32 %v537, %v538
    %v540 = vrot.slane %v539, 2
    %v541 = vadd.f32 %v539, %v540
    %v542 = vrot.slane %v541, 1
    %v543 = vadd.f32 %v541, %v542
    %s544 = vtos %v543
    %v545 = vstv %s544
    %v546 = vmul.f32 %v545, 0.0029761905
    %v547 = vmul.f32 %v503, %v503
    %548 = vadd.xlane.f32.xlu0 %v547
    %v549 = vpop.xlane.xlu0 %548
    %v550 = vrot.slane %v549, 4
    %v551 = vadd.f32 %v549, %v550
    %v552 = vrot.slane %v551, 2
    %v553 = vadd.f32 %v551, %v552
    %v554 = vrot.slane %v553, 1
    %v555 = vadd.f32 %v553, %v554
    %s556 = vtos %v555
    %v557 = vstv %s556
    %v558 = vmul.f32 %v557, 0.0029761905
    %v559 = vmul.f32 %v546, %v546
    %v560 = vsub.f32 %v558, %v559
    %v561 = vsub.f32 %v503, %v546
    %v562 = vadd.f32 %v560, 1e-05
    %v563 = vrsqrt.pop %v562
    %v564 = vmul.f32 %v561, %v563
    %v565 = vmul.f32 %v564, %v42
    %v566 = vadd.f32 %v565, %v43
    %v567 = vadd.f32 %v535, %v38
    %v568 = vadd.f32 %v566, %v39
    %v569 = vmax.f32 %v567, 0.0
    %v570 = vmax.f32 %v568, 0.0
    %571 = vst [vmem:[#allocation8] sm:$0xff] %v569
    %572 = vst [vmem:[#allocation8 + $0x8] sm:$0xff] %v570
    // Predicated region
    $region18: #{resblock_pallas_packed.1} parent=1 // pred_check
      _
    $region19: #{resblock_pallas_packed.1} parent=1 // pred_check_branch
      %574 = sbr.rel (0) target = $region21
    $region20: #{resblock_pallas_packed.1} parent=1 // pred_region
      %s576 = ssub.s32 256, 256
      %577 = vsyncadd [#allocation5], %s576
      %s579 = sshll.u32 [#allocation8], 4
      %s580 = int_to_ptr.vmem [resolvable:$true] %s579
      %582 = dma.vmem_to_hbm [thread:$0]  %s580, 256, %s2, [#allocation5]
    $region21: #{resblock_pallas_packed.1} parent=1 // pred_fallthru
      _
    // Predicated region
    $region22: #{resblock_pallas_packed.1} parent=1 // pred_check
      _
    $region23: #{resblock_pallas_packed.1} parent=1 // pred_check_branch
      %584 = sbr.rel (0) target = $region25
    $region24: #{resblock_pallas_packed.1} parent=1 // pred_region
      %585 = dma.done [#allocation5], 256
    $region25: #{resblock_pallas_packed.1} parent=1 // pred_fallthru
      _
    %586 = vsyncpa [#allocation4], 1
    %587 = vsyncpa [#allocation7], 1
    %588 = vsyncpa [#allocation5], 1

</llo_original>
